<compile_context>
chip_gen: v7x
topology: tpu7x:2x2x1
jax: 0.10.0
libtpu: 0.0.40
codegen_flags: <defaults>
</compile_context>

<pallas_src>
import jax
import jax.numpy as jnp
from jax.experimental import pallas as pl
from jax.experimental.pallas import tpu as pltpu


# ---- fixed problem dimensions & packed-parameter layout -------------------
F_IN, H1, F_OUT = 4, 6, 3
W1_OFF = 0                         # w1[k, j]  at W1_OFF + k * H1 + j      (24)
B1_OFF = W1_OFF + F_IN * H1        # b1[j]     at B1_OFF + j               (6)
W2_OFF = B1_OFF + H1               # w2[j, m]  at W2_OFF + j * F_OUT + m   (18)
B2_OFF = W2_OFF + H1 * F_OUT       # b2[m]     at B2_OFF + m               (3)
N_PARAMS = B2_OFF + F_OUT          # 51
PARAM_PAD = 64                     # pad the SMEM slab to a power of two

LANE = 128                         # lane width (fast axis)
SUBLANE_ALIGN = 16                 # SB multiple of 16 (safe for f32 and bf16 tiles)
SB_MAX = 512                       # <=512 lane-rows/step: 64K elems, ~3.7 MiB dbl-buffered
SMALL_BATCH = 4096                 # below this, plain jnp beats launch + relayout cost


def _round_up(a, b):
    return (a + b - 1) // b * b


def _iris_mlp_kernel(p_ref, x_ref, o_ref):
    """p_ref: (PARAM_PAD,) f32 SMEM; x_ref: (4, SB, 128); o_ref: (3, SB, 128) f32."""
    # Load the 4 feature planes as full (SB, 128) vreg tiles (upcast if bf16-streamed).
    x = [x_ref[k].astype(jnp.float32) for k in range(F_IN)]

    # Layer 1: h[j] = sigmoid(b1[j] + sum_k w1[k, j] * x[k])
    # Unrolled VPU broadcast-FMA chain; bias folded into the accumulator init.
    h = []
    for j in range(H1):
        acc = p_ref[B1_OFF + j] + p_ref[W1_OFF + j] * x[0]
        for k in range(1, F_IN):
            acc = acc + p_ref[W1_OFF + k * H1 + j] * x[k]
        h.append(jax.nn.sigmoid(acc))            # EUP slot

    # Layer 2: o[m] = b2[m] + sum_j w2[j, m] * h[j]
    for m in range(F_OUT):
        acc = p_ref[B2_OFF + m] + p_ref[W2_OFF + m] * h[0]
        for j in range(1, H1):
            acc = acc + p_ref[W2_OFF + j * F_OUT + m] * h[j]
        o_ref[m] = acc                           # full (SB, 128) lane-dense store


def my_iris_forward(x, w1, b1, w2, b2, *, use_pallas=None, stream_bf16=False):
    """x: [B, 4] float32; returns [B, 3] float32 logits (no softmax).

    Weights are stored [in, out] (transpose of PyTorch's [out, in]), so the
    math is x @ W + b, identical to nn.Linear.
    """
    B = x.shape[0]
    if use_pallas is None:
        use_pallas = B >= SMALL_BATCH
    if not use_pallas:
        # Tiny-batch fallback: kernel launch + relayout would dominate.
        xf = x.astype(jnp.float32)
        return jnp.dot(jax.nn.sigmoid(jnp.dot(xf, w1) + b1), w2) + b2

    # --- batch tiling: (feature, SB sublane-rows, 128 lanes) ---------------
    R = -(-B // LANE)                                    # lane rows needed
    if R <= 4 * SUBLANE_ALIGN:
        SB = _round_up(R, SUBLANE_ALIGN)                 # single grid step
    else:
        # Keep >= 4 grid steps so BlockSpec double-buffering overlaps DMA.
        SB = min(SB_MAX, _round_up(-(-R // 4), SUBLANE_ALIGN))
    R_pad = _round_up(R, SB)
    B_pad = R_pad * LANE
    grid = (R_pad // SB,)

    # Pack all parameters into one tiny f32 slab for SMEM residency.
    params = jnp.concatenate(
        [w1.reshape(-1), b1.reshape(-1), w2.reshape(-1), b2.reshape(-1)]
    ).astype(jnp.float32)
    params = jnp.pad(params, (0, PARAM_PAD - N_PARAMS))

    # Batch-on-lanes relayout: [B, 4] -> pad -> [R_pad, 128, 4] -> [4, R_pad, 128].
    in_dtype = jnp.bfloat16 if stream_bf16 else jnp.float32
    xp = jnp.pad(x.astype(in_dtype), ((0, B_pad - B), (0, 0)))
    x_t = xp.reshape(R_pad, LANE, F_IN).transpose(2, 0, 1)

    out_t = pl.pallas_call(
        _iris_mlp_kernel,
        out_shape=jax.ShapeDtypeStruct((F_OUT, R_pad, LANE), jnp.float32),
        grid=grid,
        in_specs=[
            # Single packed parameter slab, whole-array resident in SMEM.
            pl.BlockSpec(memory_space=pltpu.MemorySpace.SMEM),
            # Activations: feature planes leading, (SB, 128) dense tiles.
            pl.BlockSpec((F_IN, SB, LANE), lambda i: (0, i, 0)),
        ],
        out_specs=pl.BlockSpec((F_OUT, SB, LANE), lambda i: (0, i, 0)),
        compiler_params=pltpu.CompilerParams(
            dimension_semantics=("parallel",)),
    )(params, x_t)

    # [3, R_pad, 128] -> [B, 3] (padded tail sliced away).
    return out_t.transpose(1, 2, 0).reshape(B_pad, F_OUT)[:B]


def init_params(key):
    """Deterministic init mimicking nn.Linear's U(-1/sqrt(fan_in), 1/sqrt(fan_in))."""
    k1, k2, k3, k4 = jax.random.split(key, 4)
    bound1 = 1.0 / jnp.sqrt(4.0)
    bound2 = 1.0 / jnp.sqrt(6.0)
    # Stored as [in, out] (transpose of PyTorch's [out, in]) for direct x @ W.
    w1 = jax.random.uniform(k1, (F_IN, H1), jnp.float32, -bound1, bound1)
    b1 = jax.random.uniform(k2, (H1,), jnp.float32, -bound1, bound1)
    w2 = jax.random.uniform(k3, (H1, F_OUT), jnp.float32, -bound2, bound2)
    b2 = jax.random.uniform(k4, (F_OUT,), jnp.float32, -bound2, bound2)
    return w1, b1, w2, b2


if __name__ == "__main__":
    key = jax.random.PRNGKey(0)
    k_x, k_p = jax.random.split(key)
    w1, b1, w2, b2 = init_params(k_p)

    def ref_fn(xx):
        xf = xx.astype(jnp.float32)
        return jnp.dot(jax.nn.sigmoid(jnp.dot(xf, w1) + b1), w2) + b2

    # 1) tiny batch -> jnp fallback path
    x_small = jax.random.normal(k_x, (8, F_IN), jnp.float32)
    out_small = jax.block_until_ready(my_iris_forward(x_small, w1, b1, w2, b2))
    assert out_small.shape == (8, F_OUT)
    assert jnp.allclose(out_small, ref_fn(x_small), atol=1e-5, rtol=1e-5)

    # 2) Pallas path, single grid step + padded batch tail (B=2500 -> R=20, SB=32)
    x_mid = jax.random.normal(k_x, (2500, F_IN), jnp.float32)
    out_mid = jax.block_until_ready(
        my_iris_forward(x_mid, w1, b1, w2, b2, use_pallas=True))
    assert out_mid.shape == (2500, F_OUT)
    assert jnp.allclose(out_mid, ref_fn(x_mid), atol=1e-5, rtol=1e-5)

    # 3) Pallas path, multi-step pipelined grid (B=20000 -> R=157, SB=48, 4 steps)
    x_big = jax.random.normal(k_x, (20000, F_IN), jnp.float32)
    out_big = jax.block_until_ready(
        my_iris_forward(x_big, w1, b1, w2, b2, use_pallas=True))
    assert out_big.shape == (20000, F_OUT)
    assert jnp.allclose(out_big, ref_fn(x_big), atol=1e-5, rtol=1e-5)

    # 4) bf16-streamed input (halves read traffic); looser tolerance vs f32 ref
    out_bf = jax.block_until_ready(
        my_iris_forward(x_big, w1, b1, w2, b2, use_pallas=True, stream_bf16=True))
    assert jnp.allclose(out_bf, ref_fn(x_big), atol=5e-2, rtol=5e-2)

    print("KERNEL_OK")
</pallas_src>

<mosaic_0001>
module attributes {stable_mosaic.version = 11 : i64} {
  func.func @_iris_mlp_kernel(%arg0: i32, %arg1: memref<64xf32, #tpu.memory_space<smem>>, %arg2: memref<4x32x128xf32, #tpu.memory_space<vmem>>, %arg3: memref<3x32x128xf32, #tpu.memory_space<vmem>>) attributes {dimension_semantics = [#tpu.dimension_semantics<parallel>], iteration_bounds = array<i64: 1>, scalar_prefetch = 0 : i64, scratch_operands = 0 : i64, tpu.core_type = #tpu.core_type<tc>, window_params = [{transform_indices = @transform_0, window_bounds = array<i64: 64>}, {transform_indices = @transform_1, window_bounds = array<i64: 4, 32, 128>}, {transform_indices = @transform_2, window_bounds = array<i64: 3, 32, 128>}]} {
    %c0 = arith.constant 0 : index
    %c0_0 = arith.constant 0 : index
    %c0_1 = arith.constant 0 : index
    %0 = vector.load %arg2[%c0, %c0_0, %c0_1] : memref<4x32x128xf32, #tpu.memory_space<vmem>>, vector<1x32x128xf32>
    %1 = vector.shape_cast %0 : vector<1x32x128xf32> to vector<32x128xf32>
    %c1 = arith.constant 1 : index
    %c0_2 = arith.constant 0 : index
    %c0_3 = arith.constant 0 : index
    %2 = vector.load %arg2[%c1, %c0_2, %c0_3] : memref<4x32x128xf32, #tpu.memory_space<vmem>>, vector<1x32x128xf32>
    %3 = vector.shape_cast %2 : vector<1x32x128xf32> to vector<32x128xf32>
    %c2 = arith.constant 2 : index
    %c0_4 = arith.constant 0 : index
    %c0_5 = arith.constant 0 : index
    %4 = vector.load %arg2[%c2, %c0_4, %c0_5] : memref<4x32x128xf32, #tpu.memory_space<vmem>>, vector<1x32x128xf32>
    %5 = vector.shape_cast %4 : vector<1x32x128xf32> to vector<32x128xf32>
    %c3 = arith.constant 3 : index
    %c0_6 = arith.constant 0 : index
    %c0_7 = arith.constant 0 : index
    %6 = vector.load %arg2[%c3, %c0_6, %c0_7] : memref<4x32x128xf32, #tpu.memory_space<vmem>>, vector<1x32x128xf32>
    %7 = vector.shape_cast %6 : vector<1x32x128xf32> to vector<32x128xf32>
    %c24 = arith.constant 24 : index
    %8 = memref.load %arg1[%c24] : memref<64xf32, #tpu.memory_space<smem>>
    %c0_8 = arith.constant 0 : index
    %9 = memref.load %arg1[%c0_8] : memref<64xf32, #tpu.memory_space<smem>>
    %10 = vector.broadcast %9 : f32 to vector<32x128xf32>
    %11 = arith.mulf %10, %1 : vector<32x128xf32>
    %12 = vector.broadcast %8 : f32 to vector<32x128xf32>
    %13 = arith.addf %12, %11 : vector<32x128xf32>
    %c6 = arith.constant 6 : index
    %14 = memref.load %arg1[%c6] : memref<64xf32, #tpu.memory_space<smem>>
    %15 = vector.broadcast %14 : f32 to vector<32x128xf32>
    %16 = arith.mulf %15, %3 : vector<32x128xf32>
    %17 = arith.addf %13, %16 : vector<32x128xf32>
    %c12 = arith.constant 12 : index
    %18 = memref.load %arg1[%c12] : memref<64xf32, #tpu.memory_space<smem>>
    %19 = vector.broadcast %18 : f32 to vector<32x128xf32>
    %20 = arith.mulf %19, %5 : vector<32x128xf32>
    %21 = arith.addf %17, %20 : vector<32x128xf32>
    %c18 = arith.constant 18 : index
    %22 = memref.load %arg1[%c18] : memref<64xf32, #tpu.memory_space<smem>>
    %23 = vector.broadcast %22 : f32 to vector<32x128xf32>
    %24 = arith.mulf %23, %7 : vector<32x128xf32>
    %25 = arith.addf %21, %24 : vector<32x128xf32>
    %26 = arith.negf %25 : vector<32x128xf32>
    %27 = math.exp %26 : vector<32x128xf32>
    %cst = arith.constant 1.000000e+00 : f32
    %28 = vector.broadcast %cst : f32 to vector<32x128xf32>
    %29 = arith.addf %28, %27 : vector<32x128xf32>
    %30 = arith.divf %28, %29 : vector<32x128xf32>
    %c25 = arith.constant 25 : index
    %31 = memref.load %arg1[%c25] : memref<64xf32, #tpu.memory_space<smem>>
    %c1_9 = arith.constant 1 : index
    %32 = memref.load %arg1[%c1_9] : memref<64xf32, #tpu.memory_space<smem>>
    %33 = vector.broadcast %32 : f32 to vector<32x128xf32>
    %34 = arith.mulf %33, %1 : vector<32x128xf32>
    %35 = vector.broadcast %31 : f32 to vector<32x128xf32>
    %36 = arith.addf %35, %34 : vector<32x128xf32>
    %c7 = arith.constant 7 : index
    %37 = memref.load %arg1[%c7] : memref<64xf32, #tpu.memory_space<smem>>
    %38 = vector.broadcast %37 : f32 to vector<32x128xf32>
    %39 = arith.mulf %38, %3 : vector<32x128xf32>
    %40 = arith.addf %36, %39 : vector<32x128xf32>
    %c13 = arith.constant 13 : index
    %41 = memref.load %arg1[%c13] : memref<64xf32, #tpu.memory_space<smem>>
    %42 = vector.broadcast %41 : f32 to vector<32x128xf32>
    %43 = arith.mulf %42, %5 : vector<32x128xf32>
    %44 = arith.addf %40, %43 : vector<32x128xf32>
    %c19 = arith.constant 19 : index
    %45 = memref.load %arg1[%c19] : memref<64xf32, #tpu.memory_space<smem>>
    %46 = vector.broadcast %45 : f32 to vector<32x128xf32>
    %47 = arith.mulf %46, %7 : vector<32x128xf32>
    %48 = arith.addf %44, %47 : vector<32x128xf32>
    %49 = arith.negf %48 : vector<32x128xf32>
    %50 = math.exp %49 : vector<32x128xf32>
    %cst_10 = arith.constant 1.000000e+00 : f32
    %51 = vector.broadcast %cst_10 : f32 to vector<32x128xf32>
    %52 = arith.addf %51, %50 : vector<32x128xf32>
    %53 = arith.divf %51, %52 : vector<32x128xf32>
    %c26 = arith.constant 26 : index
    %54 = memref.load %arg1[%c26] : memref<64xf32, #tpu.memory_space<smem>>
    %c2_11 = arith.constant 2 : index
    %55 = memref.load %arg1[%c2_11] : memref<64xf32, #tpu.memory_space<smem>>
    %56 = vector.broadcast %55 : f32 to vector<32x128xf32>
    %57 = arith.mulf %56, %1 : vector<32x128xf32>
    %58 = vector.broadcast %54 : f32 to vector<32x128xf32>
    %59 = arith.addf %58, %57 : vector<32x128xf32>
    %c8 = arith.constant 8 : index
    %60 = memref.load %arg1[%c8] : memref<64xf32, #tpu.memory_space<smem>>
    %61 = vector.broadcast %60 : f32 to vector<32x128xf32>
    %62 = arith.mulf %61, %3 : vector<32x128xf32>
    %63 = arith.addf %59, %62 : vector<32x128xf32>
    %c14 = arith.constant 14 : index
    %64 = memref.load %arg1[%c14] : memref<64xf32, #tpu.memory_space<smem>>
    %65 = vector.broadcast %64 : f32 to vector<32x128xf32>
    %66 = arith.mulf %65, %5 : vector<32x128xf32>
    %67 = arith.addf %63, %66 : vector<32x128xf32>
    %c20 = arith.constant 20 : index
    %68 = memref.load %arg1[%c20] : memref<64xf32, #tpu.memory_space<smem>>
    %69 = vector.broadcast %68 : f32 to vector<32x128xf32>
    %70 = arith.mulf %69, %7 : vector<32x128xf32>
    %71 = arith.addf %67, %70 : vector<32x128xf32>
    %72 = arith.negf %71 : vector<32x128xf32>
    %73 = math.exp %72 : vector<32x128xf32>
    %cst_12 = arith.constant 1.000000e+00 : f32
    %74 = vector.broadcast %cst_12 : f32 to vector<32x128xf32>
    %75 = arith.addf %74, %73 : vector<32x128xf32>
    %76 = arith.divf %74, %75 : vector<32x128xf32>
    %c27 = arith.constant 27 : index
    %77 = memref.load %arg1[%c27] : memref<64xf32, #tpu.memory_space<smem>>
    %c3_13 = arith.constant 3 : index
    %78 = memref.load %arg1[%c3_13] : memref<64xf32, #tpu.memory_space<smem>>
    %79 = vector.broadcast %78 : f32 to vector<32x128xf32>
    %80 = arith.mulf %79, %1 : vector<32x128xf32>
    %81 = vector.broadcast %77 : f32 to vector<32x128xf32>
    %82 = arith.addf %81, %80 : vector<32x128xf32>
    %c9 = arith.constant 9 : index
    %83 = memref.load %arg1[%c9] : memref<64xf32, #tpu.memory_space<smem>>
    %84 = vector.broadcast %83 : f32 to vector<32x128xf32>
    %85 = arith.mulf %84, %3 : vector<32x128xf32>
    %86 = arith.addf %82, %85 : vector<32x128xf32>
    %c15 = arith.constant 15 : index
    %87 = memref.load %arg1[%c15] : memref<64xf32, #tpu.memory_space<smem>>
    %88 = vector.broadcast %87 : f32 to vector<32x128xf32>
    %89 = arith.mulf %88, %5 : vector<32x128xf32>
    %90 = arith.addf %86, %89 : vector<32x128xf32>
    %c21 = arith.constant 21 : index
    %91 = memref.load %arg1[%c21] : memref<64xf32, #tpu.memory_space<smem>>
    %92 = vector.broadcast %91 : f32 to vector<32x128xf32>
    %93 = arith.mulf %92, %7 : vector<32x128xf32>
    %94 = arith.addf %90, %93 : vector<32x128xf32>
    %95 = arith.negf %94 : vector<32x128xf32>
    %96 = math.exp %95 : vector<32x128xf32>
    %cst_14 = arith.constant 1.000000e+00 : f32
    %97 = vector.broadcast %cst_14 : f32 to vector<32x128xf32>
    %98 = arith.addf %97, %96 : vector<32x128xf32>
    %99 = arith.divf %97, %98 : vector<32x128xf32>
    %c28 = arith.constant 28 : index
    %100 = memref.load %arg1[%c28] : memref<64xf32, #tpu.memory_space<smem>>
    %c4 = arith.constant 4 : index
    %101 = memref.load %arg1[%c4] : memref<64xf32, #tpu.memory_space<smem>>
    %102 = vector.broadcast %101 : f32 to vector<32x128xf32>
    %103 = arith.mulf %102, %1 : vector<32x128xf32>
    %104 = vector.broadcast %100 : f32 to vector<32x128xf32>
    %105 = arith.addf %104, %103 : vector<32x128xf32>
    %c10 = arith.constant 10 : index
    %106 = memref.load %arg1[%c10] : memref<64xf32, #tpu.memory_space<smem>>
    %107 = vector.broadcast %106 : f32 to vector<32x128xf32>
    %108 = arith.mulf %107, %3 : vector<32x128xf32>
    %109 = arith.addf %105, %108 : vector<32x128xf32>
    %c16 = arith.constant 16 : index
    %110 = memref.load %arg1[%c16] : memref<64xf32, #tpu.memory_space<smem>>
    %111 = vector.broadcast %110 : f32 to vector<32x128xf32>
    %112 = arith.mulf %111, %5 : vector<32x128xf32>
    %113 = arith.addf %109, %112 : vector<32x128xf32>
    %c22 = arith.constant 22 : index
    %114 = memref.load %arg1[%c22] : memref<64xf32, #tpu.memory_space<smem>>
    %115 = vector.broadcast %114 : f32 to vector<32x128xf32>
    %116 = arith.mulf %115, %7 : vector<32x128xf32>
    %117 = arith.addf %113, %116 : vector<32x128xf32>
    %118 = arith.negf %117 : vector<32x128xf32>
    %119 = math.exp %118 : vector<32x128xf32>
    %cst_15 = arith.constant 1.000000e+00 : f32
    %120 = vector.broadcast %cst_15 : f32 to vector<32x128xf32>
    %121 = arith.addf %120, %119 : vector<32x128xf32>
    %122 = arith.divf %120, %121 : vector<32x128xf32>
    %c29 = arith.constant 29 : index
    %123 = memref.load %arg1[%c29] : memref<64xf32, #tpu.memory_space<smem>>
    %c5 = arith.constant 5 : index
    %124 = memref.load %arg1[%c5] : memref<64xf32, #tpu.memory_space<smem>>
    %125 = vector.broadcast %124 : f32 to vector<32x128xf32>
    %126 = arith.mulf %125, %1 : vector<32x128xf32>
    %127 = vector.broadcast %123 : f32 to vector<32x128xf32>
    %128 = arith.addf %127, %126 : vector<32x128xf32>
    %c11 = arith.constant 11 : index
    %129 = memref.load %arg1[%c11] : memref<64xf32, #tpu.memory_space<smem>>
    %130 = vector.broadcast %129 : f32 to vector<32x128xf32>
    %131 = arith.mulf %130, %3 : vector<32x128xf32>
    %132 = arith.addf %128, %131 : vector<32x128xf32>
    %c17 = arith.constant 17 : index
    %133 = memref.load %arg1[%c17] : memref<64xf32, #tpu.memory_space<smem>>
    %134 = vector.broadcast %133 : f32 to vector<32x128xf32>
    %135 = arith.mulf %134, %5 : vector<32x128xf32>
    %136 = arith.addf %132, %135 : vector<32x128xf32>
    %c23 = arith.constant 23 : index
    %137 = memref.load %arg1[%c23] : memref<64xf32, #tpu.memory_space<smem>>
    %138 = vector.broadcast %137 : f32 to vector<32x128xf32>
    %139 = arith.mulf %138, %7 : vector<32x128xf32>
    %140 = arith.addf %136, %139 : vector<32x128xf32>
    %141 = arith.negf %140 : vector<32x128xf32>
    %142 = math.exp %141 : vector<32x128xf32>
    %cst_16 = arith.constant 1.000000e+00 : f32
    %143 = vector.broadcast %cst_16 : f32 to vector<32x128xf32>
    %144 = arith.addf %143, %142 : vector<32x128xf32>
    %145 = arith.divf %143, %144 : vector<32x128xf32>
    %c48 = arith.constant 48 : index
    %146 = memref.load %arg1[%c48] : memref<64xf32, #tpu.memory_space<smem>>
    %c30 = arith.constant 30 : index
    %147 = memref.load %arg1[%c30] : memref<64xf32, #tpu.memory_space<smem>>
    %148 = vector.broadcast %147 : f32 to vector<32x128xf32>
    %149 = arith.mulf %148, %30 : vector<32x128xf32>
    %150 = vector.broadcast %146 : f32 to vector<32x128xf32>
    %151 = arith.addf %150, %149 : vector<32x128xf32>
    %c33 = arith.constant 33 : index
    %152 = memref.load %arg1[%c33] : memref<64xf32, #tpu.memory_space<smem>>
    %153 = vector.broadcast %152 : f32 to vector<32x128xf32>
    %154 = arith.mulf %153, %53 : vector<32x128xf32>
    %155 = arith.addf %151, %154 : vector<32x128xf32>
    %c36 = arith.constant 36 : index
    %156 = memref.load %arg1[%c36] : memref<64xf32, #tpu.memory_space<smem>>
    %157 = vector.broadcast %156 : f32 to vector<32x128xf32>
    %158 = arith.mulf %157, %76 : vector<32x128xf32>
    %159 = arith.addf %155, %158 : vector<32x128xf32>
    %c39 = arith.constant 39 : index
    %160 = memref.load %arg1[%c39] : memref<64xf32, #tpu.memory_space<smem>>
    %161 = vector.broadcast %160 : f32 to vector<32x128xf32>
    %162 = arith.mulf %161, %99 : vector<32x128xf32>
    %163 = arith.addf %159, %162 : vector<32x128xf32>
    %c42 = arith.constant 42 : index
    %164 = memref.load %arg1[%c42] : memref<64xf32, #tpu.memory_space<smem>>
    %165 = vector.broadcast %164 : f32 to vector<32x128xf32>
    %166 = arith.mulf %165, %122 : vector<32x128xf32>
    %167 = arith.addf %163, %166 : vector<32x128xf32>
    %c45 = arith.constant 45 : index
    %168 = memref.load %arg1[%c45] : memref<64xf32, #tpu.memory_space<smem>>
    %169 = vector.broadcast %168 : f32 to vector<32x128xf32>
    %170 = arith.mulf %169, %145 : vector<32x128xf32>
    %171 = arith.addf %167, %170 : vector<32x128xf32>
    %c0_17 = arith.constant 0 : index
    %c0_18 = arith.constant 0 : index
    %c0_19 = arith.constant 0 : index
    %172 = vector.load %arg3[%c0_17, %c0_18, %c0_19] : memref<3x32x128xf32, #tpu.memory_space<vmem>>, vector<1x32x128xf32>
    %173 = vector.shape_cast %172 : vector<1x32x128xf32> to vector<32x128xf32>
    %174 = vector.shape_cast %171 : vector<32x128xf32> to vector<1x32x128xf32>
    tpu.vector_store %arg3[%c0_17, %c0_18, %c0_19], %174 {strides = array<i32>} : memref<3x32x128xf32, #tpu.memory_space<vmem>>, vector<1x32x128xf32>,
    %c49 = arith.constant 49 : index
    %175 = memref.load %arg1[%c49] : memref<64xf32, #tpu.memory_space<smem>>
    %c31 = arith.constant 31 : index
    %176 = memref.load %arg1[%c31] : memref<64xf32, #tpu.memory_space<smem>>
    %177 = vector.broadcast %176 : f32 to vector<32x128xf32>
    %178 = arith.mulf %177, %30 : vector<32x128xf32>
    %179 = vector.broadcast %175 : f32 to vector<32x128xf32>
    %180 = arith.addf %179, %178 : vector<32x128xf32>
    %c34 = arith.constant 34 : index
    %181 = memref.load %arg1[%c34] : memref<64xf32, #tpu.memory_space<smem>>
    %182 = vector.broadcast %181 : f32 to vector<32x128xf32>
    %183 = arith.mulf %182, %53 : vector<32x128xf32>
    %184 = arith.addf %180, %183 : vector<32x128xf32>
    %c37 = arith.constant 37 : index
    %185 = memref.load %arg1[%c37] : memref<64xf32, #tpu.memory_space<smem>>
    %186 = vector.broadcast %185 : f32 to vector<32x128xf32>
    %187 = arith.mulf %186, %76 : vector<32x128xf32>
    %188 = arith.addf %184, %187 : vector<32x128xf32>
    %c40 = arith.constant 40 : index
    %189 = memref.load %arg1[%c40] : memref<64xf32, #tpu.memory_space<smem>>
    %190 = vector.broadcast %189 : f32 to vector<32x128xf32>
    %191 = arith.mulf %190, %99 : vector<32x128xf32>
    %192 = arith.addf %188, %191 : vector<32x128xf32>
    %c43 = arith.constant 43 : index
    %193 = memref.load %arg1[%c43] : memref<64xf32, #tpu.memory_space<smem>>
    %194 = vector.broadcast %193 : f32 to vector<32x128xf32>
    %195 = arith.mulf %194, %122 : vector<32x128xf32>
    %196 = arith.addf %192, %195 : vector<32x128xf32>
    %c46 = arith.constant 46 : index
    %197 = memref.load %arg1[%c46] : memref<64xf32, #tpu.memory_space<smem>>
    %198 = vector.broadcast %197 : f32 to vector<32x128xf32>
    %199 = arith.mulf %198, %145 : vector<32x128xf32>
    %200 = arith.addf %196, %199 : vector<32x128xf32>
    %c1_20 = arith.constant 1 : index
    %c0_21 = arith.constant 0 : index
    %c0_22 = arith.constant 0 : index
    %201 = vector.load %arg3[%c1_20, %c0_21, %c0_22] : memref<3x32x128xf32, #tpu.memory_space<vmem>>, vector<1x32x128xf32>
    %202 = vector.shape_cast %201 : vector<1x32x128xf32> to vector<32x128xf32>
    %203 = vector.shape_cast %200 : vector<32x128xf32> to vector<1x32x128xf32>
    tpu.vector_store %arg3[%c1_20, %c0_21, %c0_22], %203 {strides = array<i32>} : memref<3x32x128xf32, #tpu.memory_space<vmem>>, vector<1x32x128xf32>,
    %c50 = arith.constant 50 : index
    %204 = memref.load %arg1[%c50] : memref<64xf32, #tpu.memory_space<smem>>
    %c32 = arith.constant 32 : index
    %205 = memref.load %arg1[%c32] : memref<64xf32, #tpu.memory_space<smem>>
    %206 = vector.broadcast %205 : f32 to vector<32x128xf32>
    %207 = arith.mulf %206, %30 : vector<32x128xf32>
    %208 = vector.broadcast %204 : f32 to vector<32x128xf32>
    %209 = arith.addf %208, %207 : vector<32x128xf32>
    %c35 = arith.constant 35 : index
    %210 = memref.load %arg1[%c35] : memref<64xf32, #tpu.memory_space<smem>>
    %211 = vector.broadcast %210 : f32 to vector<32x128xf32>
    %212 = arith.mulf %211, %53 : vector<32x128xf32>
    %213 = arith.addf %209, %212 : vector<32x128xf32>
    %c38 = arith.constant 38 : index
    %214 = memref.load %arg1[%c38] : memref<64xf32, #tpu.memory_space<smem>>
    %215 = vector.broadcast %214 : f32 to vector<32x128xf32>
    %216 = arith.mulf %215, %76 : vector<32x128xf32>
    %217 = arith.addf %213, %216 : vector<32x128xf32>
    %c41 = arith.constant 41 : index
    %218 = memref.load %arg1[%c41] : memref<64xf32, #tpu.memory_space<smem>>
    %219 = vector.broadcast %218 : f32 to vector<32x128xf32>
    %220 = arith.mulf %219, %99 : vector<32x128xf32>
    %221 = arith.addf %217, %220 : vector<32x128xf32>
    %c44 = arith.constant 44 : index
    %222 = memref.load %arg1[%c44] : memref<64xf32, #tpu.memory_space<smem>>
    %223 = vector.broadcast %222 : f32 to vector<32x128xf32>
    %224 = arith.mulf %223, %122 : vector<32x128xf32>
    %225 = arith.addf %221, %224 : vector<32x128xf32>
    %c47 = arith.constant 47 : index
    %226 = memref.load %arg1[%c47] : memref<64xf32, #tpu.memory_space<smem>>
    %227 = vector.broadcast %226 : f32 to vector<32x128xf32>
    %228 = arith.mulf %227, %145 : vector<32x128xf32>
    %229 = arith.addf %225, %228 : vector<32x128xf32>
    %c2_23 = arith.constant 2 : index
    %c0_24 = arith.constant 0 : index
    %c0_25 = arith.constant 0 : index
    %230 = vector.load %arg3[%c2_23, %c0_24, %c0_25] : memref<3x32x128xf32, #tpu.memory_space<vmem>>, vector<1x32x128xf32>
    %231 = vector.shape_cast %230 : vector<1x32x128xf32> to vector<32x128xf32>
    %232 = vector.shape_cast %229 : vector<32x128xf32> to vector<1x32x128xf32>
    tpu.vector_store %arg3[%c2_23, %c0_24, %c0_25], %232 {strides = array<i32>} : memref<3x32x128xf32, #tpu.memory_space<vmem>>, vector<1x32x128xf32>,
    return
  }
  func.func @transform_0(%arg0: i32) -> i32 {
    %c0_i32 = arith.constant 0 : i32
    %c0_i32_0 = arith.constant 0 : i32
    return %c0_i32 : i32
  }
  func.func @transform_1(%arg0: i32) -> (i32, i32, i32) {
    %c0_i32 = arith.constant 0 : i32
    %c0_i32_0 = arith.constant 0 : i32
    %c0_i32_1 = arith.constant 0 : i32
    return %c0_i32, %arg0, %c0_i32_0 : i32, i32, i32
  }
  func.func @transform_2(%arg0: i32) -> (i32, i32, i32) {
    %c0_i32 = arith.constant 0 : i32
    %c0_i32_0 = arith.constant 0 : i32
    %c0_i32_1 = arith.constant 0 : i32
    return %c0_i32, %arg0, %c0_i32_0 : i32, i32, i32
  }
}

</mosaic_0001>

<llo_original>
// kernel: tpu_custom_call.1
$region0: #{tpu_custom_call.1}
  #allocation0 [shape = 'u32[]', space=smem, size = 0x4, offset = 0x4, fixed_abs, tag = 'smem constant byte address 0x4 - core index']
  #allocation1 [shape = 'u32[144,128]{1,0:T(1,128)}', space=vmem, size = 0x12000, scoped, tag = 'internal scratch']
  %s0 = inlined_call_operand.hbm [shape: f32[64], index: 0, kind: input, shape index: {}]
  %s1 = inlined_call_operand.hbm [shape: f32[4,32,128], index: 1, kind: input, shape index: {}]
  %s2 = inlined_call_operand.hbm [shape: f32[3,32,128], index: 2, kind: output, shape index: {}]
  %s3 = sld [smem:[#allocation0]]
  $region26: #{tpu_custom_call.1} parent=0
    _
  %s5 = ssub.s32 1, %s3
  %s6 = scalar_select 0, %s5, %s3
  $region1: #{tpu_custom_call.1} parent=0
    #allocation2 [shape = 'u8[512]{0}', space=smem, size = 0x200, scoped, tag = 'input window, operand 0, single buffered']
    #allocation3 [shape = 's32[1]{0}', space=sflag, size = 0x4, scoped, tag = 'scoped memory for tpu_custom_call.1']
    #allocation4 [shape = 's32[1]{0}', space=sflag, size = 0x4, scoped, tag = 'scoped memory for tpu_custom_call.1']
    #allocation5 [shape = 's32[1]{0}', space=sflag, size = 0x4, scoped, tag = 'scoped memory for tpu_custom_call.1']
    #allocation6 [shape = 'u8[65536]{0}', space=vmem, size = 0x10000, scoped, tag = 'input window, operand 1, single buffered']
    #allocation7 [shape = 'u8[49152]{0}', space=vmem, size = 0xc000, scoped, tag = 'output window, operand 0, single buffered']
    %7 = vsyncpa [#allocation5], 0
    %8 = vsyncpa [#allocation3], 0
    %9 = vsyncpa [#allocation4], 0
    // Predicated region
    $region2: #{tpu_custom_call.1} parent=1 // pred_check
      _
    $region3: #{tpu_custom_call.1} parent=1 // pred_check_branch
      %11 = sbr.rel (0) target = $region5
    $region4: #{tpu_custom_call.1} parent=1 // pred_region
      %s13 = ssub.s32 16, 16
      %14 = vsyncadd [#allocation5], %s13
      %17 = dma.hbm_to_smem %s0, 16, [#allocation2], [#allocation5]
    $region5: #{tpu_custom_call.1} parent=1 // pred_fallthru
      _
    // Predicated region
    $region6: #{tpu_custom_call.1} parent=1 // pred_check
      _
    $region7: #{tpu_custom_call.1} parent=1 // pred_check_branch
      %19 = sbr.rel (0) target = $region9
    $region8: #{tpu_custom_call.1} parent=1 // pred_region
      %s21 = ssub.s32 2048, 2048
      %22 = vsyncadd [#allocation3], %s21
      %s23 = sshll.u32 [#allocation6], 4
      %s24 = int_to_ptr.vmem [resolvable:$true] %s23
      %29 = dma.hbm_to_vmem [thread:$0]  %s1, 2048, %s24, [#allocation3], 128, 128, 8
    $region9: #{tpu_custom_call.1} parent=1 // pred_fallthru
      _
    // Predicated region
    $region10: #{tpu_custom_call.1} parent=1 // pred_check
      _
    $region11: #{tpu_custom_call.1} parent=1 // pred_check_branch
      %31 = sbr.rel (0) target = $region13
    $region12: #{tpu_custom_call.1} parent=1 // pred_region
      %32 = dma.done [#allocation5], 16
    $region13: #{tpu_custom_call.1} parent=1 // pred_fallthru
      _
    // Predicated region
    $region14: #{tpu_custom_call.1} parent=1 // pred_check
      _
    $region15: #{tpu_custom_call.1} parent=1 // pred_check_branch
      %34 = sbr.rel (0) target = $region17
    $region16: #{tpu_custom_call.1} parent=1 // pred_region
      %35 = dma.done [#allocation3], 2048
    $region17: #{tpu_custom_call.1} parent=1 // pred_fallthru
      _
    %36 = sfence
    %v37 = vld [vmem:[#allocation6] sm:$0xff]
    %v38 = vld [vmem:[#allocation6 + $0x8] sm:$0xff]
    %v39 = vld [vmem:[#allocation6 + $0x10] sm:$0xff]
    %v40 = vld [vmem:[#allocation6 + $0x18] sm:$0xff]
    %s41 = scalar_lea.vmem [#allocation6], 32
    %v42 = vld [vmem:[%s41] sm:$0xff]
    %v43 = vld [vmem:[%s41 + $0x8] sm:$0xff]
    %v44 = vld [vmem:[%s41 + $0x10] sm:$0xff]
    %v45 = vld [vmem:[%s41 + $0x18] sm:$0xff]
    %s46 = scalar_lea.vmem [#allocation6], 64
    %v47 = vld [vmem:[%s46] sm:$0xff]
    %v48 = vld [vmem:[%s46 + $0x8] sm:$0xff]
    %v49 = vld [vmem:[%s46 + $0x10] sm:$0xff]
    %v50 = vld [vmem:[%s46 + $0x18] sm:$0xff]
    %s51 = scalar_lea.vmem [#allocation6], 96
    %v52 = vld [vmem:[%s51] sm:$0xff]
    %v53 = vld [vmem:[%s51 + $0x8] sm:$0xff]
    %v54 = vld [vmem:[%s51 + $0x10] sm:$0xff]
    %v55 = vld [vmem:[%s51 + $0x18] sm:$0xff]
    %s56 = sld [smem:[#allocation2 + $0x18]]
    %s57 = sld [smem:[#allocation2]]
    %v58 = vstv %s57
    %v59 = vmul.f32 %v58, %v37
    %v60 = vmul.f32 %v58, %v38
    %v61 = vmul.f32 %v58, %v39
    %v62 = vmul.f32 %v58, %v40
    %v63 = vstv %s56
    %v64 = vadd.f32 %v63, %v59
    %v65 = vadd.f32 %v63, %v60
    %v66 = vadd.f32 %v63, %v61
    %v67 = vadd.f32 %v63, %v62
    %s68 = sld [smem:[#allocation2 + $0x6]]
    %v69 = vstv %s68
    %v70 = vmul.f32 %v69, %v42
    %v71 = vmul.f32 %v69, %v43
    %v72 = vmul.f32 %v69, %v44
    %v73 = vmul.f32 %v69, %v45
    %v74 = vadd.f32 %v64, %v70
    %v75 = vadd.f32 %v65, %v71
    %v76 = vadd.f32 %v66, %v72
    %v77 = vadd.f32 %v67, %v73
    %s78 = sld [smem:[#allocation2 + $0xc]]
    %v79 = vstv %s78
    %v80 = vmul.f32 %v79, %v47
    %v81 = vmul.f32 %v79, %v48
    %v82 = vmul.f32 %v79, %v49
    %v83 = vmul.f32 %v79, %v50
    %v84 = vadd.f32 %v74, %v80
    %v85 = vadd.f32 %v75, %v81
    %v86 = vadd.f32 %v76, %v82
    %v87 = vadd.f32 %v77, %v83
    %s88 = sld [smem:[#allocation2 + $0x12]]
    %v89 = vstv %s88
    %v90 = vmul.f32 %v89, %v52
    %v91 = vmul.f32 %v89, %v53
    %v92 = vmul.f32 %v89, %v54
    %v93 = vmul.f32 %v89, %v55
    %v94 = vadd.f32 %v84, %v90
    %v95 = vadd.f32 %v85, %v91
    %v96 = vadd.f32 %v86, %v92
    %v97 = vadd.f32 %v87, %v93
    %v98 = vxor.u32 %v94, 2147483648
    %v99 = vxor.u32 %v95, 2147483648
    %v100 = vxor.u32 %v96, 2147483648
    %v101 = vxor.u32 %v97, 2147483648
    %v102 = vmul.f32 %v98, 1.442695
    %v103 = vpow.pop %v102
    %v104 = vmul.f32 %v99, 1.442695
    %v105 = vpow.pop %v104
    %v106 = vmul.f32 %v100, 1.442695
    %v107 = vpow.pop %v106
    %v108 = vmul.f32 %v101, 1.442695
    %v109 = vpow.pop %v108
    %v110 = vadd.f32 %v103, 1.0
    %v111 = vadd.f32 %v105, 1.0
    %v112 = vadd.f32 %v107, 1.0
    %v113 = vadd.f32 %v109, 1.0
    %v114 = vrcp.pop %v110
    %v115 = vmul.f32 1.0, %v114
    %v116 = vrcp.pop %v111
    %v117 = vmul.f32 1.0, %v116
    %v118 = vrcp.pop %v112
    %v119 = vmul.f32 1.0, %v118
    %v120 = vrcp.pop %v113
    %v121 = vmul.f32 1.0, %v120
    %s122 = sld [smem:[#allocation2 + $0x19]]
    %s123 = sld [smem:[#allocation2 + $0x1]]
    %v124 = vstv %s123
    %v125 = vmul.f32 %v124, %v37
    %v126 = vmul.f32 %v124, %v38
    %v127 = vmul.f32 %v124, %v39
    %v128 = vmul.f32 %v124, %v40
    %v129 = vstv %s122
    %v130 = vadd.f32 %v129, %v125
    %v131 = vadd.f32 %v129, %v126
    %v132 = vadd.f32 %v129, %v127
    %v133 = vadd.f32 %v129, %v128
    %s134 = sld [smem:[#allocation2 + $0x7]]
    %v135 = vstv %s134
    %v136 = vmul.f32 %v135, %v42
    %v137 = vmul.f32 %v135, %v43
    %v138 = vmul.f32 %v135, %v44
    %v139 = vmul.f32 %v135, %v45
    %v140 = vadd.f32 %v130, %v136
    %v141 = vadd.f32 %v131, %v137
    %v142 = vadd.f32 %v132, %v138
    %v143 = vadd.f32 %v133, %v139
    %s144 = sld [smem:[#allocation2 + $0xd]]
    %v145 = vstv %s144
    %v146 = vmul.f32 %v145, %v47
    %v147 = vmul.f32 %v145, %v48
    %v148 = vmul.f32 %v145, %v49
    %v149 = vmul.f32 %v145, %v50
    %v150 = vadd.f32 %v140, %v146
    %v151 = vadd.f32 %v141, %v147
    %v152 = vadd.f32 %v142, %v148
    %v153 = vadd.f32 %v143, %v149
    %s154 = sld [smem:[#allocation2 + $0x13]]
    %v155 = vstv %s154
    %v156 = vmul.f32 %v155, %v52
    %v157 = vmul.f32 %v155, %v53
    %v158 = vmul.f32 %v155, %v54
    %v159 = vmul.f32 %v155, %v55
    %v160 = vadd.f32 %v150, %v156
    %v161 = vadd.f32 %v151, %v157
    %v162 = vadd.f32 %v152, %v158
    %v163 = vadd.f32 %v153, %v159
    %v164 = vxor.u32 %v160, 2147483648
    %v165 = vxor.u32 %v161, 2147483648
    %v166 = vxor.u32 %v162, 2147483648
    %v167 = vxor.u32 %v163, 2147483648
    %v168 = vmul.f32 %v164, 1.442695
    %v169 = vpow.pop %v168
    %v170 = vmul.f32 %v165, 1.442695
    %v171 = vpow.pop %v170
    %v172 = vmul.f32 %v166, 1.442695
    %v173 = vpow.pop %v172
    %v174 = vmul.f32 %v167, 1.442695
    %v175 = vpow.pop %v174
    %v176 = vadd.f32 %v169, 1.0
    %v177 = vadd.f32 %v171, 1.0
    %v178 = vadd.f32 %v173, 1.0
    %v179 = vadd.f32 %v175, 1.0
    %v180 = vrcp.pop %v176
    %v181 = vmul.f32 1.0, %v180
    %v182 = vrcp.pop %v177
    %v183 = vmul.f32 1.0, %v182
    %v184 = vrcp.pop %v178
    %v185 = vmul.f32 1.0, %v184
    %v186 = vrcp.pop %v179
    %v187 = vmul.f32 1.0, %v186
    %s188 = sld [smem:[#allocation2 + $0x1a]]
    %s189 = sld [smem:[#allocation2 + $0x2]]
    %v190 = vstv %s189
    %v191 = vmul.f32 %v190, %v37
    %v192 = vmul.f32 %v190, %v38
    %v193 = vmul.f32 %v190, %v39
    %v194 = vmul.f32 %v190, %v40
    %v195 = vstv %s188
    %v196 = vadd.f32 %v195, %v191
    %v197 = vadd.f32 %v195, %v192
    %v198 = vadd.f32 %v195, %v193
    %v199 = vadd.f32 %v195, %v194
    %s200 = sld [smem:[#allocation2 + $0x8]]
    %v201 = vstv %s200
    %v202 = vmul.f32 %v201, %v42
    %v203 = vmul.f32 %v201, %v43
    %v204 = vmul.f32 %v201, %v44
    %v205 = vmul.f32 %v201, %v45
    %v206 = vadd.f32 %v196, %v202
    %v207 = vadd.f32 %v197, %v203
    %v208 = vadd.f32 %v198, %v204
    %v209 = vadd.f32 %v199, %v205
    %s210 = sld [smem:[#allocation2 + $0xe]]
    %v211 = vstv %s210
    %v212 = vmul.f32 %v211, %v47
    %v213 = vmul.f32 %v211, %v48
    %v214 = vmul.f32 %v211, %v49
    %v215 = vmul.f32 %v211, %v50
    %v216 = vadd.f32 %v206, %v212
    %v217 = vadd.f32 %v207, %v213
    %v218 = vadd.f32 %v208, %v214
    %v219 = vadd.f32 %v209, %v215
    %s220 = sld [smem:[#allocation2 + $0x14]]
    %v221 = vstv %s220
    %v222 = vmul.f32 %v221, %v52
    %v223 = vmul.f32 %v221, %v53
    %v224 = vmul.f32 %v221, %v54
    %v225 = vmul.f32 %v221, %v55
    %v226 = vadd.f32 %v216, %v222
    %v227 = vadd.f32 %v217, %v223
    %v228 = vadd.f32 %v218, %v224
    %v229 = vadd.f32 %v219, %v225
    %v230 = vxor.u32 %v226, 2147483648
    %v231 = vxor.u32 %v227, 2147483648
    %v232 = vxor.u32 %v228, 2147483648
    %v233 = vxor.u32 %v229, 2147483648
    %v234 = vmul.f32 %v230, 1.442695
    %v235 = vpow.pop %v234
    %v236 = vmul.f32 %v231, 1.442695
    %v237 = vpow.pop %v236
    %v238 = vmul.f32 %v232, 1.442695
    %v239 = vpow.pop %v238
    %v240 = vmul.f32 %v233, 1.442695
    %v241 = vpow.pop %v240
    %v242 = vadd.f32 %v235, 1.0
    %v243 = vadd.f32 %v237, 1.0
    %v244 = vadd.f32 %v239, 1.0
    %v245 = vadd.f32 %v241, 1.0
    %v246 = vrcp.pop %v242
    %v247 = vmul.f32 1.0, %v246
    %v248 = vrcp.pop %v243
    %v249 = vmul.f32 1.0, %v248
    %v250 = vrcp.pop %v244
    %v251 = vmul.f32 1.0, %v250
    %v252 = vrcp.pop %v245
    %v253 = vmul.f32 1.0, %v252
    %s254 = sld [smem:[#allocation2 + $0x1b]]
    %s255 = sld [smem:[#allocation2 + $0x3]]
    %v256 = vstv %s255
    %v257 = vmul.f32 %v256, %v37
    %v258 = vmul.f32 %v256, %v38
    %v259 = vmul.f32 %v256, %v39
    %v260 = vmul.f32 %v256, %v40
    %v261 = vstv %s254
    %v262 = vadd.f32 %v261, %v257
    %v263 = vadd.f32 %v261, %v258
    %v264 = vadd.f32 %v261, %v259
    %v265 = vadd.f32 %v261, %v260
    %s266 = sld [smem:[#allocation2 + $0x9]]
    %v267 = vstv %s266
    %v268 = vmul.f32 %v267, %v42
    %v269 = vmul.f32 %v267, %v43
    %v270 = vmul.f32 %v267, %v44
    %v271 = vmul.f32 %v267, %v45
    %v272 = vadd.f32 %v262, %v268
    %v273 = vadd.f32 %v263, %v269
    %v274 = vadd.f32 %v264, %v270
    %v275 = vadd.f32 %v265, %v271
    %s276 = sld [smem:[#allocation2 + $0xf]]
    %v277 = vstv %s276
    %v278 = vmul.f32 %v277, %v47
    %v279 = vmul.f32 %v277, %v48
    %v280 = vmul.f32 %v277, %v49
    %v281 = vmul.f32 %v277, %v50
    %v282 = vadd.f32 %v272, %v278
    %v283 = vadd.f32 %v273, %v279
    %v284 = vadd.f32 %v274, %v280
    %v285 = vadd.f32 %v275, %v281
    %s286 = sld [smem:[#allocation2 + $0x15]]
    %v287 = vstv %s286
    %v288 = vmul.f32 %v287, %v52
    %v289 = vmul.f32 %v287, %v53
    %v290 = vmul.f32 %v287, %v54
    %v291 = vmul.f32 %v287, %v55
    %v292 = vadd.f32 %v282, %v288
    %v293 = vadd.f32 %v283, %v289
    %v294 = vadd.f32 %v284, %v290
    %v295 = vadd.f32 %v285, %v291
    %v296 = vxor.u32 %v292, 2147483648
    %v297 = vxor.u32 %v293, 2147483648
    %v298 = vxor.u32 %v294, 2147483648
    %v299 = vxor.u32 %v295, 2147483648
    %v300 = vmul.f32 %v296, 1.442695
    %v301 = vpow.pop %v300
    %v302 = vmul.f32 %v297, 1.442695
    %v303 = vpow.pop %v302
    %v304 = vmul.f32 %v298, 1.442695
    %v305 = vpow.pop %v304
    %v306 = vmul.f32 %v299, 1.442695
    %v307 = vpow.pop %v306
    %v308 = vadd.f32 %v301, 1.0
    %v309 = vadd.f32 %v303, 1.0
    %v310 = vadd.f32 %v305, 1.0
    %v311 = vadd.f32 %v307, 1.0
    %v312 = vrcp.pop %v308
    %v313 = vmul.f32 1.0, %v312
    %v314 = vrcp.pop %v309
    %v315 = vmul.f32 1.0, %v314
    %v316 = vrcp.pop %v310
    %v317 = vmul.f32 1.0, %v316
    %v318 = vrcp.pop %v311
    %v319 = vmul.f32 1.0, %v318
    %s320 = sld [smem:[#allocation2 + $0x1c]]
    %s321 = sld [smem:[#allocation2 + $0x4]]
    %v322 = vstv %s321
    %v323 = vmul.f32 %v322, %v37
    %v324 = vmul.f32 %v322, %v38
    %v325 = vmul.f32 %v322, %v39
    %v326 = vmul.f32 %v322, %v40
    %v327 = vstv %s320
    %v328 = vadd.f32 %v327, %v323
    %v329 = vadd.f32 %v327, %v324
    %v330 = vadd.f32 %v327, %v325
    %v331 = vadd.f32 %v327, %v326
    %s332 = sld [smem:[#allocation2 + $0xa]]
    %v333 = vstv %s332
    %v334 = vmul.f32 %v333, %v42
    %v335 = vmul.f32 %v333, %v43
    %v336 = vmul.f32 %v333, %v44
    %v337 = vmul.f32 %v333, %v45
    %v338 = vadd.f32 %v328, %v334
    %v339 = vadd.f32 %v329, %v335
    %v340 = vadd.f32 %v330, %v336
    %v341 = vadd.f32 %v331, %v337
    %s342 = sld [smem:[#allocation2 + $0x10]]
    %v343 = vstv %s342
    %v344 = vmul.f32 %v343, %v47
    %v345 = vmul.f32 %v343, %v48
    %v346 = vmul.f32 %v343, %v49
    %v347 = vmul.f32 %v343, %v50
    %v348 = vadd.f32 %v338, %v344
    %v349 = vadd.f32 %v339, %v345
    %v350 = vadd.f32 %v340, %v346
    %v351 = vadd.f32 %v341, %v347
    %s352 = sld [smem:[#allocation2 + $0x16]]
    %v353 = vstv %s352
    %v354 = vmul.f32 %v353, %v52
    %v355 = vmul.f32 %v353, %v53
    %v356 = vmul.f32 %v353, %v54
    %v357 = vmul.f32 %v353, %v55
    %v358 = vadd.f32 %v348, %v354
    %v359 = vadd.f32 %v349, %v355
    %v360 = vadd.f32 %v350, %v356
    %v361 = vadd.f32 %v351, %v357
    %v362 = vxor.u32 %v358, 2147483648
    %v363 = vxor.u32 %v359, 2147483648
    %v364 = vxor.u32 %v360, 2147483648
    %v365 = vxor.u32 %v361, 2147483648
    %v366 = vmul.f32 %v362, 1.442695
    %v367 = vpow.pop %v366
    %v368 = vmul.f32 %v363, 1.442695
    %v369 = vpow.pop %v368
    %v370 = vmul.f32 %v364, 1.442695
    %v371 = vpow.pop %v370
    %v372 = vmul.f32 %v365, 1.442695
    %v373 = vpow.pop %v372
    %v374 = vadd.f32 %v367, 1.0
    %v375 = vadd.f32 %v369, 1.0
    %v376 = vadd.f32 %v371, 1.0
    %v377 = vadd.f32 %v373, 1.0
    %v378 = vrcp.pop %v374
    %v379 = vmul.f32 1.0, %v378
    %v380 = vrcp.pop %v375
    %v381 = vmul.f32 1.0, %v380
    %v382 = vrcp.pop %v376
    %v383 = vmul.f32 1.0, %v382
    %v384 = vrcp.pop %v377
    %v385 = vmul.f32 1.0, %v384
    %s386 = sld [smem:[#allocation2 + $0x1d]]
    %s387 = sld [smem:[#allocation2 + $0x5]]
    %v388 = vstv %s387
    %v389 = vmul.f32 %v388, %v37
    %v390 = vmul.f32 %v388, %v38
    %v391 = vmul.f32 %v388, %v39
    %v392 = vmul.f32 %v388, %v40
    %v393 = vstv %s386
    %v394 = vadd.f32 %v393, %v389
    %v395 = vadd.f32 %v393, %v390
    %v396 = vadd.f32 %v393, %v391
    %v397 = vadd.f32 %v393, %v392
    %s398 = sld [smem:[#allocation2 + $0xb]]
    %v399 = vstv %s398
    %v400 = vmul.f32 %v399, %v42
    %v401 = vmul.f32 %v399, %v43
    %v402 = vmul.f32 %v399, %v44
    %v403 = vmul.f32 %v399, %v45
    %v404 = vadd.f32 %v394, %v400
    %v405 = vadd.f32 %v395, %v401
    %v406 = vadd.f32 %v396, %v402
    %v407 = vadd.f32 %v397, %v403
    %s408 = sld [smem:[#allocation2 + $0x11]]
    %v409 = vstv %s408
    %v410 = vmul.f32 %v409, %v47
    %v411 = vmul.f32 %v409, %v48
    %v412 = vmul.f32 %v409, %v49
    %v413 = vmul.f32 %v409, %v50
    %v414 = vadd.f32 %v404, %v410
    %v415 = vadd.f32 %v405, %v411
    %v416 = vadd.f32 %v406, %v412
    %v417 = vadd.f32 %v407, %v413
    %s418 = sld [smem:[#allocation2 + $0x17]]
    %v419 = vstv %s418
    %v420 = vmul.f32 %v419, %v52
    %v421 = vmul.f32 %v419, %v53
    %v422 = vmul.f32 %v419, %v54
    %v423 = vmul.f32 %v419, %v55
    %v424 = vadd.f32 %v414, %v420
    %v425 = vadd.f32 %v415, %v421
    %v426 = vadd.f32 %v416, %v422
    %v427 = vadd.f32 %v417, %v423
    %v428 = vxor.u32 %v424, 2147483648
    %v429 = vxor.u32 %v425, 2147483648
    %v430 = vxor.u32 %v426, 2147483648
    %v431 = vxor.u32 %v427, 2147483648
    %v432 = vmul.f32 %v428, 1.442695
    %v433 = vpow.pop %v432
    %v434 = vmul.f32 %v429, 1.442695
    %v435 = vpow.pop %v434
    %v436 = vmul.f32 %v430, 1.442695
    %v437 = vpow.pop %v436
    %v438 = vmul.f32 %v431, 1.442695
    %v439 = vpow.pop %v438
    %v440 = vadd.f32 %v433, 1.0
    %v441 = vadd.f32 %v435, 1.0
    %v442 = vadd.f32 %v437, 1.0
    %v443 = vadd.f32 %v439, 1.0
    %v444 = vrcp.pop %v440
    %v445 = vmul.f32 1.0, %v444
    %v446 = vrcp.pop %v441
    %v447 = vmul.f32 1.0, %v446
    %v448 = vrcp.pop %v442
    %v449 = vmul.f32 1.0, %v448
    %v450 = vrcp.pop %v443
    %v451 = vmul.f32 1.0, %v450
    %s452 = sld [smem:[#allocation2 + $0x30]]
    %s453 = sld [smem:[#allocation2 + $0x1e]]
    %v454 = vstv %s453
    %v455 = vmul.f32 %v454, %v115
    %v456 = vmul.f32 %v454, %v117
    %v457 = vmul.f32 %v454, %v119
    %v458 = vmul.f32 %v454, %v121
    %v459 = vstv %s452
    %v460 = vadd.f32 %v459, %v455
    %v461 = vadd.f32 %v459, %v456
    %v462 = vadd.f32 %v459, %v457
    %v463 = vadd.f32 %v459, %v458
    %s464 = sld [smem:[#allocation2 + $0x21]]
    %v465 = vstv %s464
    %v466 = vmul.f32 %v465, %v181
    %v467 = vmul.f32 %v465, %v183
    %v468 = vmul.f32 %v465, %v185
    %v469 = vmul.f32 %v465, %v187
    %v470 = vadd.f32 %v460, %v466
    %v471 = vadd.f32 %v461, %v467
    %v472 = vadd.f32 %v462, %v468
    %v473 = vadd.f32 %v463, %v469
    %s474 = sld [smem:[#allocation2 + $0x24]]
    %v475 = vstv %s474
    %v476 = vmul.f32 %v475, %v247
    %v477 = vmul.f32 %v475, %v249
    %v478 = vmul.f32 %v475, %v251
    %v479 = vmul.f32 %v475, %v253
    %v480 = vadd.f32 %v470, %v476
    %v481 = vadd.f32 %v471, %v477
    %v482 = vadd.f32 %v472, %v478
    %v483 = vadd.f32 %v473, %v479
    %s484 = sld [smem:[#allocation2 + $0x27]]
    %v485 = vstv %s484
    %v486 = vmul.f32 %v485, %v313
    %v487 = vmul.f32 %v485, %v315
    %v488 = vmul.f32 %v485, %v317
    %v489 = vmul.f32 %v485, %v319
    %v490 = vadd.f32 %v480, %v486
    %v491 = vadd.f32 %v481, %v487
    %v492 = vadd.f32 %v482, %v488
    %v493 = vadd.f32 %v483, %v489
    %s494 = sld [smem:[#allocation2 + $0x2a]]
    %v495 = vstv %s494
    %v496 = vmul.f32 %v495, %v379
    %v497 = vmul.f32 %v495, %v381
    %v498 = vmul.f32 %v495, %v383
    %v499 = vmul.f32 %v495, %v385
    %v500 = vadd.f32 %v490, %v496
    %v501 = vadd.f32 %v491, %v497
    %v502 = vadd.f32 %v492, %v498
    %v503 = vadd.f32 %v493, %v499
    %s504 = sld [smem:[#allocation2 + $0x2d]]
    %v505 = vstv %s504
    %v506 = vmul.f32 %v505, %v445
    %v507 = vmul.f32 %v505, %v447
    %v508 = vmul.f32 %v505, %v449
    %v509 = vmul.f32 %v505, %v451
    %v510 = vadd.f32 %v500, %v506
    %v511 = vadd.f32 %v501, %v507
    %v512 = vadd.f32 %v502, %v508
    %v513 = vadd.f32 %v503, %v509
    %514 = vst [vmem:[#allocation7] sm:$0xff] %v510
    %515 = vst [vmem:[#allocation7 + $0x8] sm:$0xff] %v511
    %516 = vst [vmem:[#allocation7 + $0x10] sm:$0xff] %v512
    %517 = vst [vmem:[#allocation7 + $0x18] sm:$0xff] %v513
    %s518 = sld [smem:[#allocation2 + $0x31]]
    %s519 = sld [smem:[#allocation2 + $0x1f]]
    %v520 = vstv %s519
    %v521 = vmul.f32 %v520, %v115
    %v522 = vmul.f32 %v520, %v117
    %v523 = vmul.f32 %v520, %v119
    %v524 = vmul.f32 %v520, %v121
    %v525 = vstv %s518
    %v526 = vadd.f32 %v525, %v521
    %v527 = vadd.f32 %v525, %v522
    %v528 = vadd.f32 %v525, %v523
    %v529 = vadd.f32 %v525, %v524
    %s530 = sld [smem:[#allocation2 + $0x22]]
    %v531 = vstv %s530
    %v532 = vmul.f32 %v531, %v181
    %v533 = vmul.f32 %v531, %v183
    %v534 = vmul.f32 %v531, %v185
    %v535 = vmul.f32 %v531, %v187
    %v536 = vadd.f32 %v526, %v532
    %v537 = vadd.f32 %v527, %v533
    %v538 = vadd.f32 %v528, %v534
    %v539 = vadd.f32 %v529, %v535
    %s540 = sld [smem:[#allocation2 + $0x25]]
    %v541 = vstv %s540
    %v542 = vmul.f32 %v541, %v247
    %v543 = vmul.f32 %v541, %v249
    %v544 = vmul.f32 %v541, %v251
    %v545 = vmul.f32 %v541, %v253
    %v546 = vadd.f32 %v536, %v542
    %v547 = vadd.f32 %v537, %v543
    %v548 = vadd.f32 %v538, %v544
    %v549 = vadd.f32 %v539, %v545
    %s550 = sld [smem:[#allocation2 + $0x28]]
    %v551 = vstv %s550
    %v552 = vmul.f32 %v551, %v313
    %v553 = vmul.f32 %v551, %v315
    %v554 = vmul.f32 %v551, %v317
    %v555 = vmul.f32 %v551, %v319
    %v556 = vadd.f32 %v546, %v552
    %v557 = vadd.f32 %v547, %v553
    %v558 = vadd.f32 %v548, %v554
    %v559 = vadd.f32 %v549, %v555
    %s560 = sld [smem:[#allocation2 + $0x2b]]
    %v561 = vstv %s560
    %v562 = vmul.f32 %v561, %v379
    %v563 = vmul.f32 %v561, %v381
    %v564 = vmul.f32 %v561, %v383
    %v565 = vmul.f32 %v561, %v385
    %v566 = vadd.f32 %v556, %v562
    %v567 = vadd.f32 %v557, %v563
    %v568 = vadd.f32 %v558, %v564
    %v569 = vadd.f32 %v559, %v565
    %s570 = sld [smem:[#allocation2 + $0x2e]]
    %v571 = vstv %s570
    %v572 = vmul.f32 %v571, %v445
    %v573 = vmul.f32 %v571, %v447
    %v574 = vmul.f32 %v571, %v449
    %v575 = vmul.f32 %v571, %v451
    %v576 = vadd.f32 %v566, %v572
    %v577 = vadd.f32 %v567, %v573
    %v578 = vadd.f32 %v568, %v574
    %v579 = vadd.f32 %v569, %v575
    %s580 = scalar_lea.vmem [#allocation7], 32
    %581 = vst [vmem:[%s580] sm:$0xff] %v576
    %582 = vst [vmem:[%s580 + $0x8] sm:$0xff] %v577
    %583 = vst [vmem:[%s580 + $0x10] sm:$0xff] %v578
    %584 = vst [vmem:[%s580 + $0x18] sm:$0xff] %v579
    %s585 = sld [smem:[#allocation2 + $0x32]]
    %s586 = sld [smem:[#allocation2 + $0x20]]
    %v587 = vstv %s586
    %v588 = vmul.f32 %v587, %v115
    %v589 = vmul.f32 %v587, %v117
    %v590 = vmul.f32 %v587, %v119
    %v591 = vmul.f32 %v587, %v121
    %v592 = vstv %s585
    %v593 = vadd.f32 %v592, %v588
    %v594 = vadd.f32 %v592, %v589
    %v595 = vadd.f32 %v592, %v590
    %v596 = vadd.f32 %v592, %v591
    %s597 = sld [smem:[#allocation2 + $0x23]]
    %v598 = vstv %s597
    %v599 = vmul.f32 %v598, %v181
    %v600 = vmul.f32 %v598, %v183
    %v601 = vmul.f32 %v598, %v185
    %v602 = vmul.f32 %v598, %v187
    %v603 = vadd.f32 %v593, %v599
    %v604 = vadd.f32 %v594, %v600
    %v605 = vadd.f32 %v595, %v601
    %v606 = vadd.f32 %v596, %v602
    %s607 = sld [smem:[#allocation2 + $0x26]]
    %v608 = vstv %s607
    %v609 = vmul.f32 %v608, %v247
    %v610 = vmul.f32 %v608, %v249
    %v611 = vmul.f32 %v608, %v251
    %v612 = vmul.f32 %v608, %v253
    %v613 = vadd.f32 %v603, %v609
    %v614 = vadd.f32 %v604, %v610
    %v615 = vadd.f32 %v605, %v611
    %v616 = vadd.f32 %v606, %v612
    %s617 = sld [smem:[#allocation2 + $0x29]]
    %v618 = vstv %s617
    %v619 = vmul.f32 %v618, %v313
    %v620 = vmul.f32 %v618, %v315
    %v621 = vmul.f32 %v618, %v317
    %v622 = vmul.f32 %v618, %v319
    %v623 = vadd.f32 %v613, %v619
    %v624 = vadd.f32 %v614, %v620
    %v625 = vadd.f32 %v615, %v621
    %v626 = vadd.f32 %v616, %v622
    %s627 = sld [smem:[#allocation2 + $0x2c]]
    %v628 = vstv %s627
    %v629 = vmul.f32 %v628, %v379
    %v630 = vmul.f32 %v628, %v381
    %v631 = vmul.f32 %v628, %v383
    %v632 = vmul.f32 %v628, %v385
    %v633 = vadd.f32 %v623, %v629
    %v634 = vadd.f32 %v624, %v630
    %v635 = vadd.f32 %v625, %v631
    %v636 = vadd.f32 %v626, %v632
    %s637 = sld [smem:[#allocation2 + $0x2f]]
    %v638 = vstv %s637
    %v639 = vmul.f32 %v638, %v445
    %v640 = vmul.f32 %v638, %v447
    %v641 = vmul.f32 %v638, %v449
    %v642 = vmul.f32 %v638, %v451
    %v643 = vadd.f32 %v633, %v639
    %v644 = vadd.f32 %v634, %v640
    %v645 = vadd.f32 %v635, %v641
    %v646 = vadd.f32 %v636, %v642
    %s647 = scalar_lea.vmem [#allocation7], 64
    %648 = vst [vmem:[%s647] sm:$0xff] %v643
    %649 = vst [vmem:[%s647 + $0x8] sm:$0xff] %v644
    %650 = vst [vmem:[%s647 + $0x10] sm:$0xff] %v645
    %651 = vst [vmem:[%s647 + $0x18] sm:$0xff] %v646
    // Predicated region
    $region18: #{tpu_custom_call.1} parent=1 // pred_check
      _
    $region19: #{tpu_custom_call.1} parent=1 // pred_check_branch
      %653 = sbr.rel (0) target = $region21
    $region20: #{tpu_custom_call.1} parent=1 // pred_region
      %s655 = ssub.s32 1536, 1536
      %656 = vsyncadd [#allocation4], %s655
      %s657 = sshll.u32 [#allocation7], 4
      %s658 = int_to_ptr.vmem [resolvable:$true] %s657
      %663 = dma.vmem_to_hbm [thread:$0]  %s658, 1536, %s2, [#allocation4], 128, 128, 8
    $region21: #{tpu_custom_call.1} parent=1 // pred_fallthru
      _
    // Predicated region
    $region22: #{tpu_custom_call.1} parent=1 // pred_check
      _
    $region23: #{tpu_custom_call.1} parent=1 // pred_check_branch
      %665 = sbr.rel (0) target = $region25
    $region24: #{tpu_custom_call.1} parent=1 // pred_region
      %666 = dma.done [#allocation4], 1536
    $region25: #{tpu_custom_call.1} parent=1 // pred_fallthru
      _
    %667 = vsyncpa [#allocation3], 1
    %668 = vsyncpa [#allocation4], 1
    %669 = vsyncpa [#allocation5], 1

</llo_original>
